<compile_context>
chip_gen: v6e
topology: v6e:2x2x1
jax: 0.10.0
libtpu: 0.0.40
codegen_flags: <defaults>
</compile_context>

<pallas_src>
import jax
import jax.numpy as jnp
from jax.experimental import pallas as pl
from jax.experimental.pallas import tpu as pltpu


def _mlp_kernel(x_ref, w1_ref, b1_ref, w2_ref, b2_ref, w3_ref, b3_ref,
                ws_ref, o_ref):
    # x_ref : (D, TB)   batch on lanes
    # w1    : (H, D)    PyTorch (out, in) layout
    # b1,b2 : (H, 1)    column biases (broadcast over lanes)
    # w2    : (H, H)
    # w3    : (H, 1)    fc3 weight as a column (reduce over sublanes)
    # b3,ws : (1, 1)    SMEM scalars
    x = x_ref[...]                                   # (D, TB)
    D = x.shape[0]

    # ---- fc1: K=D (tiny) -> VPU broadcast FMAs, not MXU -------------------
    h = w1_ref[:, 0:1] * x[0:1, :]                   # (H,1)*(1,TB) -> (H,TB)
    for d in range(1, D):
        h = h + w1_ref[:, d:d + 1] * x[d:d + 1, :]
    h = jnp.tanh(h + b1_ref[...])                    # (H, TB)

    # ---- fc2: HxH on the MXU ----------------------------------------------
    h = jnp.tanh(
        jnp.dot(w2_ref[...], h, preferred_element_type=jnp.float32)
        + b2_ref[...])                               # (H, TB)

    # ---- fc3: N=1 -> sublane reduction on VPU/XLU, not MXU ----------------
    e = (jnp.sum(w3_ref[...] * h, axis=0, keepdims=True)
         + b3_ref[0, 0])                             # (1, TB)

    # ---- ||x||^e  ==  exp(0.5 * e * log(sum(x^2))), zero-norm guarded -----
    ss = jnp.sum(x * x, axis=0, keepdims=True)       # (1, TB), sum over D sublanes
    log_ss = jnp.log(jnp.maximum(ss, jnp.float32(1e-37)))
    pow_pos = jnp.exp(0.5 * e * log_ss)
    # pow(0, e): 0 if e>0, 1 if e==0, inf if e<0 (matches torch.pow on f64)
    zero_case = jnp.where(e > 0, 0.0, jnp.where(e < 0, jnp.inf, 1.0))
    out = jnp.where(ss > 0, pow_pos, zero_case)

    scale = 3.9 * ws_ref[0, 0]                       # scalar (SMEM)
    o_ref[...] = scale * out                         # (1, TB) lane-dense store


def neural_net_forward(x, params, hidden_layer_size, *, batch_tile=4096):
    """Forward pass of NeuralNet.  x: (B, D) float32 -> (B, 1) float32."""
    B, D = x.shape
    if hidden_layer_size <= 0:
        # PyTorch branch: 0 * fc1(0 * x) == exact zeros of shape (B, 1).
        return jnp.zeros((B, 1), dtype=x.dtype)

    w1, b1, w2, b2, w3, b3, ws = params
    H = hidden_layer_size

    # Batch on lanes; pad batch to a multiple of the lane tile.
    xT = x.T                                                   # (D, B)
    TB = min(batch_tile, pl.cdiv(B, 128) * 128)
    B_pad = pl.cdiv(B, TB) * TB
    if B_pad != B:
        xT = jnp.pad(xT, ((0, 0), (0, B_pad - B)))

    out = pl.pallas_call(
        _mlp_kernel,
        out_shape=jax.ShapeDtypeStruct((1, B_pad), jnp.float32),
        grid=(B_pad // TB,),
        in_specs=[
            pl.BlockSpec((D, TB), lambda i: (0, i)),           # x, batch-tiled
            pl.BlockSpec((H, D), lambda i: (0, 0)),            # w1 (resident)
            pl.BlockSpec((H, 1), lambda i: (0, 0)),            # b1
            pl.BlockSpec((H, H), lambda i: (0, 0)),            # w2
            pl.BlockSpec((H, 1), lambda i: (0, 0)),            # b2
            pl.BlockSpec((H, 1), lambda i: (0, 0)),            # w3
            pl.BlockSpec(memory_space=pltpu.MemorySpace.SMEM),  # b3 scalar
            pl.BlockSpec(memory_space=pltpu.MemorySpace.SMEM),  # ws scalar
        ],
        out_specs=pl.BlockSpec((1, TB), lambda i: (0, i)),
        compiler_params=pltpu.CompilerParams(
            dimension_semantics=("parallel",)),
    )(xT, w1, b1, w2, b2, w3, b3, ws)

    return out[:, :B].T                                        # (B, 1)


def init_params(key, input_size, hidden_layer_size):
    """Deterministic init mimicking nn.Linear's U(-1/sqrt(fan_in), 1/sqrt(fan_in)).

    Weights kept in PyTorch (out, in) layout; biases stored as (out, 1) columns
    so they broadcast over the lane (batch) axis inside the kernel.
    """
    D, H = input_size, hidden_layer_size
    ks = jax.random.split(key, 7)

    def lin(k, fan_in, shape):
        bound = 1.0 / jnp.sqrt(jnp.float32(fan_in))
        return jax.random.uniform(k, shape, jnp.float32, -bound, bound)

    w1 = lin(ks[0], D, (H, D))
    b1 = lin(ks[1], D, (H, 1))
    w2 = lin(ks[2], H, (H, H))
    b2 = lin(ks[3], H, (H, 1))
    w3 = lin(ks[4], H, (H, 1))      # fc3 weight as a column
    b3 = lin(ks[5], H, (1, 1))
    ws = lin(ks[6], 1, (1, 1))      # scaling, no bias
    return (w1, b1, w2, b2, w3, b3, ws)


def reference_forward(x, params):
    """Pure-JAX reference of the same math (correctness check)."""
    w1, b1, w2, b2, w3, b3, ws = params
    h = jnp.tanh(x @ w1.T + b1.T)
    h = jnp.tanh(h @ w2.T + b2.T)
    e = h @ w3 + b3
    nrm = jnp.linalg.norm(x, axis=-1, keepdims=True)
    return 3.9 * ws[0, 0] * (nrm ** e)


if __name__ == "__main__":
    key = jax.random.PRNGKey(0)
    k_x, k_p = jax.random.split(key)

    input_size = 3          # EddyLifetime consumes 3-component wave-vectors
    hidden_layer_size = 32
    batch = 16

    x = jax.random.normal(k_x, (batch, input_size), dtype=jnp.float32)
    params = init_params(k_p, input_size, hidden_layer_size)

    out = neural_net_forward(x, params, hidden_layer_size)
    out = jax.block_until_ready(out)

    ref = reference_forward(x, params)
    assert out.shape == (batch, 1)
    assert jnp.allclose(out, ref, rtol=2e-4, atol=1e-5), (out, ref)

    print("KERNEL_OK")
</pallas_src>

<mosaic_0001>
module attributes {stable_mosaic.version = 11 : i64} {
  func.func @_mlp_kernel(%arg0: i32, %arg1: memref<3x128xf32, #tpu.memory_space<vmem>>, %arg2: memref<32x3xf32, #tpu.memory_space<vmem>>, %arg3: memref<32x1xf32, #tpu.memory_space<vmem>>, %arg4: memref<32x32xf32, #tpu.memory_space<vmem>>, %arg5: memref<32x1xf32, #tpu.memory_space<vmem>>, %arg6: memref<32x1xf32, #tpu.memory_space<vmem>>, %arg7: memref<1x1xf32, #tpu.memory_space<smem>>, %arg8: memref<1x1xf32, #tpu.memory_space<smem>>, %arg9: memref<1x128xf32, #tpu.memory_space<vmem>>) attributes {dimension_semantics = [#tpu.dimension_semantics<parallel>], iteration_bounds = array<i64: 1>, scalar_prefetch = 0 : i64, scratch_operands = 0 : i64, tpu.core_type = #tpu.core_type<tc>, window_params = [{transform_indices = @transform_0, window_bounds = array<i64: 3, 128>}, {pipeline_mode = #tpu.pipeline_mode<synchronous>, transform_indices = @transform_1, window_bounds = array<i64: 32, 3>}, {pipeline_mode = #tpu.pipeline_mode<synchronous>, transform_indices = @transform_2, window_bounds = array<i64: 32, 1>}, {pipeline_mode = #tpu.pipeline_mode<synchronous>, transform_indices = @transform_3, window_bounds = array<i64: 32, 32>}, {pipeline_mode = #tpu.pipeline_mode<synchronous>, transform_indices = @transform_4, window_bounds = array<i64: 32, 1>}, {pipeline_mode = #tpu.pipeline_mode<synchronous>, transform_indices = @transform_5, window_bounds = array<i64: 32, 1>}, {transform_indices = @transform_6, window_bounds = array<i64: 1, 1>}, {transform_indices = @transform_7, window_bounds = array<i64: 1, 1>}, {transform_indices = @transform_8, window_bounds = array<i64: 1, 128>}]} {
    %c0 = arith.constant 0 : index
    %c0_0 = arith.constant 0 : index
    %0 = vector.load %arg1[%c0, %c0_0] : memref<3x128xf32, #tpu.memory_space<vmem>>, vector<3x128xf32>
    %c0_1 = arith.constant 0 : index
    %c0_2 = arith.constant 0 : index
    %1 = vector.load %arg2[%c0_1, %c0_2] : memref<32x3xf32, #tpu.memory_space<vmem>>, vector<32x1xf32>
    %2 = vector.extract_strided_slice %0 {offsets = [0, 0], sizes = [1, 128], strides = [1, 1]} : vector<3x128xf32> to vector<1x128xf32>
    %3 = vector.broadcast %1 : vector<32x1xf32> to vector<32x128xf32>
    %4 = vector.broadcast %2 : vector<1x128xf32> to vector<32x128xf32>
    %5 = arith.mulf %3, %4 : vector<32x128xf32>
    %c0_3 = arith.constant 0 : index
    %c1 = arith.constant 1 : index
    %6 = vector.load %arg2[%c0_3, %c1] : memref<32x3xf32, #tpu.memory_space<vmem>>, vector<32x1xf32>
    %7 = vector.extract_strided_slice %0 {offsets = [1, 0], sizes = [1, 128], strides = [1, 1]} : vector<3x128xf32> to vector<1x128xf32>
    %8 = vector.broadcast %6 : vector<32x1xf32> to vector<32x128xf32>
    %9 = vector.broadcast %7 : vector<1x128xf32> to vector<32x128xf32>
    %10 = arith.mulf %8, %9 : vector<32x128xf32>
    %11 = arith.addf %5, %10 : vector<32x128xf32>
    %c0_4 = arith.constant 0 : index
    %c2 = arith.constant 2 : index
    %12 = vector.load %arg2[%c0_4, %c2] : memref<32x3xf32, #tpu.memory_space<vmem>>, vector<32x1xf32>
    %13 = vector.extract_strided_slice %0 {offsets = [2, 0], sizes = [1, 128], strides = [1, 1]} : vector<3x128xf32> to vector<1x128xf32>
    %14 = vector.broadcast %12 : vector<32x1xf32> to vector<32x128xf32>
    %15 = vector.broadcast %13 : vector<1x128xf32> to vector<32x128xf32>
    %16 = arith.mulf %14, %15 : vector<32x128xf32>
    %17 = arith.addf %11, %16 : vector<32x128xf32>
    %c0_5 = arith.constant 0 : index
    %c0_6 = arith.constant 0 : index
    %18 = vector.load %arg3[%c0_5, %c0_6] : memref<32x1xf32, #tpu.memory_space<vmem>>, vector<32x1xf32>
    %19 = vector.broadcast %18 : vector<32x1xf32> to vector<32x128xf32>
    %20 = arith.addf %17, %19 : vector<32x128xf32>
    %21 = math.tanh %20 : vector<32x128xf32>
    %c0_7 = arith.constant 0 : index
    %c0_8 = arith.constant 0 : index
    %22 = vector.load %arg4[%c0_7, %c0_8] : memref<32x32xf32, #tpu.memory_space<vmem>>, vector<32x32xf32>
    %cst = arith.constant dense<0.000000e+00> : vector<32x128xf32>
    %23 = tpu.matmul %22, %21, %cst {dimension_numbers = #tpu.dot_dimension_numbers<[1], [0], [0], [1], [0, 0, 1, 1], [], []>} : vector<32x32xf32>, vector<32x128xf32>, vector<32x128xf32> -> vector<32x128xf32>
    %c0_9 = arith.constant 0 : index
    %c0_10 = arith.constant 0 : index
    %24 = vector.load %arg5[%c0_9, %c0_10] : memref<32x1xf32, #tpu.memory_space<vmem>>, vector<32x1xf32>
    %25 = vector.broadcast %24 : vector<32x1xf32> to vector<32x128xf32>
    %26 = arith.addf %23, %25 : vector<32x128xf32>
    %27 = math.tanh %26 : vector<32x128xf32>
    %c0_11 = arith.constant 0 : index
    %c0_12 = arith.constant 0 : index
    %28 = vector.load %arg6[%c0_11, %c0_12] : memref<32x1xf32, #tpu.memory_space<vmem>>, vector<32x1xf32>
    %29 = vector.broadcast %28 : vector<32x1xf32> to vector<32x128xf32>
    %30 = arith.mulf %29, %27 : vector<32x128xf32>
    %cst_13 = arith.constant dense<0.000000e+00> : vector<128xf32>
    %31 = vector.multi_reduction <add>, %30, %cst_13 [0] : vector<32x128xf32> to vector<128xf32>
    %32 = vector.shape_cast %31 : vector<128xf32> to vector<1x128xf32>
    %c0_14 = arith.constant 0 : index
    %c0_15 = arith.constant 0 : index
    %33 = memref.load %arg7[%c0_14, %c0_15] : memref<1x1xf32, #tpu.memory_space<smem>>
    %34 = vector.broadcast %33 : f32 to vector<1x128xf32>
    %35 = arith.addf %32, %34 : vector<1x128xf32>
    %36 = arith.mulf %0, %0 : vector<3x128xf32>
    %cst_16 = arith.constant dense<0.000000e+00> : vector<128xf32>
    %37 = vector.multi_reduction <add>, %36, %cst_16 [0] : vector<3x128xf32> to vector<128xf32>
    %38 = vector.shape_cast %37 : vector<128xf32> to vector<1x128xf32>
    %cst_17 = arith.constant 9.99999991E-38 : f32
    %39 = vector.broadcast %cst_17 : f32 to vector<1x128xf32>
    %40 = arith.maximumf %38, %39 : vector<1x128xf32>
    %41 = math.log %40 : vector<1x128xf32>
    %cst_18 = arith.constant 5.000000e-01 : f32
    %42 = vector.broadcast %cst_18 : f32 to vector<1x128xf32>
    %43 = arith.mulf %42, %35 : vector<1x128xf32>
    %44 = arith.mulf %43, %41 : vector<1x128xf32>
    %45 = math.exp %44 : vector<1x128xf32>
    %cst_19 = arith.constant 0.000000e+00 : f32
    %46 = vector.broadcast %cst_19 : f32 to vector<1x128xf32>
    %47 = arith.cmpf ogt, %35, %46 : vector<1x128xf32>
    %cst_20 = arith.constant 0.000000e+00 : f32
    %48 = vector.broadcast %cst_20 : f32 to vector<1x128xf32>
    %49 = arith.cmpf olt, %35, %48 : vector<1x128xf32>
    %cst_21 = arith.constant 0x7F800000 : f32
    %cst_22 = arith.constant 1.000000e+00 : f32
    %50 = vector.broadcast %cst_21 : f32 to vector<1x128xf32>
    %51 = vector.broadcast %cst_22 : f32 to vector<1x128xf32>
    %52 = arith.select %49, %50, %51 : vector<1x128xi1>, vector<1x128xf32>
    %cst_23 = arith.constant 0.000000e+00 : f32
    %53 = vector.broadcast %cst_23 : f32 to vector<1x128xf32>
    %54 = arith.select %47, %53, %52 : vector<1x128xi1>, vector<1x128xf32>
    %cst_24 = arith.constant 0.000000e+00 : f32
    %55 = vector.broadcast %cst_24 : f32 to vector<1x128xf32>
    %56 = arith.cmpf ogt, %38, %55 : vector<1x128xf32>
    %57 = arith.select %56, %45, %54 : vector<1x128xi1>, vector<1x128xf32>
    %c0_25 = arith.constant 0 : index
    %c0_26 = arith.constant 0 : index
    %58 = memref.load %arg8[%c0_25, %c0_26] : memref<1x1xf32, #tpu.memory_space<smem>>
    %cst_27 = arith.constant 3.900000e+00 : f32
    %59 = arith.mulf %cst_27, %58 : f32
    %60 = vector.broadcast %59 : f32 to vector<1x128xf32>
    %61 = arith.mulf %60, %57 : vector<1x128xf32>
    %c0_28 = arith.constant 0 : index
    %c0_29 = arith.constant 0 : index
    %62 = vector.load %arg9[%c0_28, %c0_29] : memref<1x128xf32, #tpu.memory_space<vmem>>, vector<1x128xf32>
    tpu.vector_store %arg9[%c0_28, %c0_29], %61 {strides = array<i32>} : memref<1x128xf32, #tpu.memory_space<vmem>>, vector<1x128xf32>,
    return
  }
  func.func @transform_0(%arg0: i32) -> (i32, i32) {
    %c0_i32 = arith.constant 0 : i32
    %c0_i32_0 = arith.constant 0 : i32
    return %c0_i32, %arg0 : i32, i32
  }
  func.func @transform_1(%arg0: i32) -> (i32, i32) {
    %c0_i32 = arith.constant 0 : i32
    %c0_i32_0 = arith.constant 0 : i32
    %c0_i32_1 = arith.constant 0 : i32
    return %c0_i32, %c0_i32_0 : i32, i32
  }
  func.func @transform_2(%arg0: i32) -> (i32, i32) {
    %c0_i32 = arith.constant 0 : i32
    %c0_i32_0 = arith.constant 0 : i32
    %c0_i32_1 = arith.constant 0 : i32
    return %c0_i32, %c0_i32_0 : i32, i32
  }
  func.func @transform_3(%arg0: i32) -> (i32, i32) {
    %c0_i32 = arith.constant 0 : i32
    %c0_i32_0 = arith.constant 0 : i32
    %c0_i32_1 = arith.constant 0 : i32
    return %c0_i32, %c0_i32_0 : i32, i32
  }
  func.func @transform_4(%arg0: i32) -> (i32, i32) {
    %c0_i32 = arith.constant 0 : i32
    %c0_i32_0 = arith.constant 0 : i32
    %c0_i32_1 = arith.constant 0 : i32
    return %c0_i32, %c0_i32_0 : i32, i32
  }
  func.func @transform_5(%arg0: i32) -> (i32, i32) {
    %c0_i32 = arith.constant 0 : i32
    %c0_i32_0 = arith.constant 0 : i32
    %c0_i32_1 = arith.constant 0 : i32
    return %c0_i32, %c0_i32_0 : i32, i32
  }
  func.func @transform_6(%arg0: i32) -> (i32, i32) {
    %c0_i32 = arith.constant 0 : i32
    %c0_i32_0 = arith.constant 0 : i32
    %c0_i32_1 = arith.constant 0 : i32
    return %c0_i32, %c0_i32_0 : i32, i32
  }
  func.func @transform_7(%arg0: i32) -> (i32, i32) {
    %c0_i32 = arith.constant 0 : i32
    %c0_i32_0 = arith.constant 0 : i32
    %c0_i32_1 = arith.constant 0 : i32
    return %c0_i32, %c0_i32_0 : i32, i32
  }
  func.func @transform_8(%arg0: i32) -> (i32, i32) {
    %c0_i32 = arith.constant 0 : i32
    %c0_i32_0 = arith.constant 0 : i32
    return %c0_i32, %arg0 : i32, i32
  }
}

</mosaic_0001>

<llo_original>
// kernel: tpu_custom_call.1
$region0: #{tpu_custom_call.1}
  #allocation0 [shape = 'u32[]', space=smem, size = 0x4, offset = 0x4, fixed_abs, tag = 'smem constant byte address 0x4 - core index']
  #allocation1 [shape = 'u32[144,128]{1,0:T(1,128)}', space=vmem, size = 0x12000, scoped, tag = 'internal scratch']
  #allocation2 [shape = 'f32[1,1]{1,0:T(1,128)S(6)}', space=smem, size = 0x200, scoped, tag = 'scoped memory for tpu_custom_call.1']
  #allocation3 [shape = 'f32[1,1]{1,0:T(1,128)S(6)}', space=smem, size = 0x200, scoped, tag = 'scoped memory for tpu_custom_call.1']
  %s0 = inlined_call_operand.vmem [shape: f32[3,128], index: 0, kind: input, shape index: {}]
  %s1 = inlined_call_operand.vmem [shape: f32[32,3], index: 1, kind: input, shape index: {}]
  %s2 = inlined_call_operand.vmem [shape: f32[32,1], index: 2, kind: input, shape index: {}]
  %s3 = inlined_call_operand.vmem [shape: f32[32,32], index: 3, kind: input, shape index: {}]
  %s4 = inlined_call_operand.vmem [shape: f32[32,1], index: 4, kind: input, shape index: {}]
  %s5 = inlined_call_operand.vmem [shape: f32[32,1], index: 5, kind: input, shape index: {}]
  %s6 = inlined_call_operand.<no memory space> [shape: f32[1,1], index: 6, kind: input, shape index: {}]
  %s7 = inlined_call_operand.<no memory space> [shape: f32[1,1], index: 7, kind: input, shape index: {}]
  %s8 = inlined_call_operand.hbm [shape: f32[1,128], index: 8, kind: output, shape index: {}]
  %s9 = sld [smem:[#allocation0]]
  $region42: #{tpu_custom_call.1} parent=0
    _
  %s11 = ssub.s32 1, %s9
  %s12 = scalar_select 0, %s11, %s9
  %13 = sst [smem:[#allocation2]] %s6
  %14 = sst [smem:[#allocation3]] %s7
  $region1: #{tpu_custom_call.1} parent=0
    #allocation4 [shape = 'u8[512]{0}', space=vmem, size = 0x400, scoped, tag = 'output window, operand 0, single buffered']
    #allocation5 [shape = 's32[1]{0}', space=sflag, size = 0x4, scoped, tag = 'scoped memory for tpu_custom_call.1']
    %15 = vsyncpa [#allocation5], 0
    // Predicated region
    $region2: #{tpu_custom_call.1} parent=1 // pred_check
      _
    $region3: #{tpu_custom_call.1} parent=1 // pred_check_branch
      %17 = sbr.rel (0) target = $region5
    $region4: #{tpu_custom_call.1} parent=1 // pred_region
      _
    $region5: #{tpu_custom_call.1} parent=1 // pred_fallthru
      _
    // Predicated region
    $region6: #{tpu_custom_call.1} parent=1 // pred_check
      _
    $region7: #{tpu_custom_call.1} parent=1 // pred_check_branch
      %19 = sbr.rel (0) target = $region9
    $region8: #{tpu_custom_call.1} parent=1 // pred_region
      _
    $region9: #{tpu_custom_call.1} parent=1 // pred_fallthru
      _
    // Predicated region
    $region10: #{tpu_custom_call.1} parent=1 // pred_check
      _
    $region11: #{tpu_custom_call.1} parent=1 // pred_check_branch
      %21 = sbr.rel (0) target = $region13
    $region12: #{tpu_custom_call.1} parent=1 // pred_region
      _
    $region13: #{tpu_custom_call.1} parent=1 // pred_fallthru
      _
    // Predicated region
    $region14: #{tpu_custom_call.1} parent=1 // pred_check
      _
    $region15: #{tpu_custom_call.1} parent=1 // pred_check_branch
      %23 = sbr.rel (0) target = $region17
    $region16: #{tpu_custom_call.1} parent=1 // pred_region
      _
    $region17: #{tpu_custom_call.1} parent=1 // pred_fallthru
      _
    // Predicated region
    $region18: #{tpu_custom_call.1} parent=1 // pred_check
      _
    $region19: #{tpu_custom_call.1} parent=1 // pred_check_branch
      %25 = sbr.rel (0) target = $region21
    $region20: #{tpu_custom_call.1} parent=1 // pred_region
      _
    $region21: #{tpu_custom_call.1} parent=1 // pred_fallthru
      _
    // Predicated region
    $region22: #{tpu_custom_call.1} parent=1 // pred_check
      _
    $region23: #{tpu_custom_call.1} parent=1 // pred_check_branch
      %27 = sbr.rel (0) target = $region25
    $region24: #{tpu_custom_call.1} parent=1 // pred_region
      _
    $region25: #{tpu_custom_call.1} parent=1 // pred_fallthru
      _
    // Predicated region
    $region26: #{tpu_custom_call.1} parent=1 // pred_check
      _
    $region27: #{tpu_custom_call.1} parent=1 // pred_check_branch
      %29 = sbr.rel (0) target = $region29
    $region28: #{tpu_custom_call.1} parent=1 // pred_region
      _
    $region29: #{tpu_custom_call.1} parent=1 // pred_fallthru
      _
    // Predicated region
    $region30: #{tpu_custom_call.1} parent=1 // pred_check
      _
    $region31: #{tpu_custom_call.1} parent=1 // pred_check_branch
      %31 = sbr.rel (0) target = $region33
    $region32: #{tpu_custom_call.1} parent=1 // pred_region
      _
    $region33: #{tpu_custom_call.1} parent=1 // pred_fallthru
      _
    %v32 = vld [vmem:[%s0] sm:$0x7]
    %v33 = vld [vmem:[%s1] sm:$0xff]
    %v34 = vld [vmem:[%s1 + $0x8] sm:$0xff]
    %v35 = vld [vmem:[%s1 + $0x10] sm:$0xff]
    %v36 = vld [vmem:[%s1 + $0x18] sm:$0xff]
    %38 = vset.pattern.permute.xlu0 0
    %39 = vperm.xlu0 %38, %v33
    %v40 = vpop.permute.xlu0 %39
    %43 = vset.pattern.permute.xlu0 0
    %44 = vperm.xlu0 %43, %v34
    %v45 = vpop.permute.xlu0 %44
    %48 = vset.pattern.permute.xlu0 0
    %49 = vperm.xlu0 %48, %v35
    %v50 = vpop.permute.xlu0 %49
    %53 = vset.pattern.permute.xlu0 0
    %54 = vperm.xlu0 %53, %v36
    %v55 = vpop.permute.xlu0 %54
    %v57 = vlaneseq
    %v58 = vshrl.u32 %v57, 7
    %v59 = vsub.s32 0, %v58
    %v60 = vrot.slane %v32, %v59
    %v61 = vmul.f32 %v40, %v60
    %v62 = vmul.f32 %v45, %v60
    %v63 = vmul.f32 %v50, %v60
    %v64 = vmul.f32 %v55, %v60
    %65 = vset.pattern.permute.xlu0 1
    %66 = vperm.xlu0 %65, %v33
    %v67 = vpop.permute.xlu0 %66
    %69 = vset.pattern.permute.xlu0 1
    %70 = vperm.xlu0 %69, %v34
    %v71 = vpop.permute.xlu0 %70
    %73 = vset.pattern.permute.xlu0 1
    %74 = vperm.xlu0 %73, %v35
    %v75 = vpop.permute.xlu0 %74
    %77 = vset.pattern.permute.xlu0 1
    %78 = vperm.xlu0 %77, %v36
    %v79 = vpop.permute.xlu0 %78
    %v81 = vlaneseq
    %v82 = vshrl.u32 %v81, 7
    %v83 = vsub.s32 1, %v82
    %v84 = vrot.slane %v32, %v83
    %v85 = vmul.f32 %v67, %v84
    %v86 = vmul.f32 %v71, %v84
    %v87 = vmul.f32 %v75, %v84
    %v88 = vmul.f32 %v79, %v84
    %v89 = vadd.f32 %v61, %v85
    %v90 = vadd.f32 %v62, %v86
    %v91 = vadd.f32 %v63, %v87
    %v92 = vadd.f32 %v64, %v88
    %93 = vset.pattern.permute.xlu0 2
    %94 = vperm.xlu0 %93, %v33
    %v95 = vpop.permute.xlu0 %94
    %97 = vset.pattern.permute.xlu0 2
    %98 = vperm.xlu0 %97, %v34
    %v99 = vpop.permute.xlu0 %98
    %101 = vset.pattern.permute.xlu0 2
    %102 = vperm.xlu0 %101, %v35
    %v103 = vpop.permute.xlu0 %102
    %105 = vset.pattern.permute.xlu0 2
    %106 = vperm.xlu0 %105, %v36
    %v107 = vpop.permute.xlu0 %106
    %v109 = vlaneseq
    %v110 = vshrl.u32 %v109, 7
    %v111 = vsub.s32 2, %v110
    %v112 = vrot.slane %v32, %v111
    %v113 = vmul.f32 %v95, %v112
    %v114 = vmul.f32 %v99, %v112
    %v115 = vmul.f32 %v103, %v112
    %v116 = vmul.f32 %v107, %v112
    %v117 = vadd.f32 %v89, %v113
    %v118 = vadd.f32 %v90, %v114
    %v119 = vadd.f32 %v91, %v115
    %v120 = vadd.f32 %v92, %v116
    %v121 = vld [vmem:[%s2] sm:$0xff]
    %v122 = vld [vmem:[%s2 + $0x8] sm:$0xff]
    %v123 = vld [vmem:[%s2 + $0x10] sm:$0xff]
    %v124 = vld [vmem:[%s2 + $0x18] sm:$0xff]
    %126 = vset.pattern.permute.xlu0 0
    %127 = vperm.xlu0 %126, %v121
    %v128 = vpop.permute.xlu0 %127
    %131 = vset.pattern.permute.xlu0 0
    %132 = vperm.xlu0 %131, %v122
    %v133 = vpop.permute.xlu0 %132
    %136 = vset.pattern.permute.xlu0 0
    %137 = vperm.xlu0 %136, %v123
    %v138 = vpop.permute.xlu0 %137
    %141 = vset.pattern.permute.xlu0 0
    %142 = vperm.xlu0 %141, %v124
    %v143 = vpop.permute.xlu0 %142
    %v145 = vadd.f32 %v117, %v128
    %v146 = vadd.f32 %v118, %v133
    %v147 = vadd.f32 %v119, %v138
    %v148 = vadd.f32 %v120, %v143
    %v149 = vtanh.pop %v145
    %v150 = vtanh.pop %v146
    %v151 = vtanh.pop %v147
    %v152 = vtanh.pop %v148
    %v153 = vld [vmem:[%s3] sm:$0xff]
    %v154 = vld [vmem:[%s3 + $0x8] sm:$0xff]
    %v155 = vld [vmem:[%s3 + $0x10] sm:$0xff]
    %v156 = vld [vmem:[%s3 + $0x18] sm:$0xff]
    %v157 = vld [vmem:[%s4] sm:$0xff]
    %v158 = vld [vmem:[%s4 + $0x8] sm:$0xff]
    %v159 = vld [vmem:[%s4 + $0x10] sm:$0xff]
    %v160 = vld [vmem:[%s4 + $0x18] sm:$0xff]
    %162 = vset.pattern.permute.xlu0 0
    %163 = vperm.xlu0 %162, %v157
    %v164 = vpop.permute.xlu0 %163
    %167 = vset.pattern.permute.xlu0 0
    %168 = vperm.xlu0 %167, %v158
    %v169 = vpop.permute.xlu0 %168
    %172 = vset.pattern.permute.xlu0 0
    %173 = vperm.xlu0 %172, %v159
    %v174 = vpop.permute.xlu0 %173
    %177 = vset.pattern.permute.xlu0 0
    %178 = vperm.xlu0 %177, %v160
    %v179 = vpop.permute.xlu0 %178
    %vm181 = vcmask 261120
    %v183 = vsel %vm181, %v153, 0
    %v186 = vsel %vm181, %v154, 0
    %v189 = vsel %vm181, %v155, 0
    %v192 = vsel %vm181, %v156, 0
    %194 = vmatprep.subr.mxu0 0.0
    %195 = vmatpush1.msra.mxu0 0.0
    %196 = vmatprep.subr.mxu0 0.0
    %197 = vmatpush1.msra.mxu0 0.0
    %198 = vmatprep.subr.mxu0 0.0
    %199 = vmatpush1.msra.mxu0 0.0
    %200 = vmatprep.subr.mxu0 0.0
    %201 = vmatpush1.msra.mxu0 0.0
    %202 = vmatprep.subr.mxu0 0.0
    %203 = vmatpush1.msra.mxu0 0.0
    %204 = vmatprep.subr.mxu0 0.0
    %205 = vmatpush1.msra.mxu0 0.0
    %206 = vmatprep.subr.mxu0 0.0
    %207 = vmatpush1.msra.mxu0 0.0
    %208 = vmatprep.subr.mxu0 0.0
    %209 = vmatpush1.msra.mxu0 0.0
    %210 = vmatprep.subr.mxu0 0.0
    %211 = vmatpush1.msra.mxu0 0.0
    %212 = vmatprep.subr.mxu0 0.0
    %213 = vmatpush1.msra.mxu0 0.0
    %214 = vmatprep.subr.mxu0 0.0
    %215 = vmatpush1.msra.mxu0 0.0
    %216 = vmatprep.subr.mxu0 0.0
    %217 = vmatpush1.msra.mxu0 0.0
    %218 = vmatprep.subr.mxu0 0.0
    %219 = vmatpush1.msra.mxu0 %v152
    %220 = vmatprep.subr.mxu0 0.0
    %221 = vmatpush1.msra.mxu0 %v151
    %222 = vmatprep.subr.mxu0 0.0
    %223 = vmatpush1.msra.mxu0 %v150
    %224 = vmatprep.subr.mxu0 0.0
    %225 = vmatpush1.msra.mxu0 %v149
    %226 = vmatprep.subr.mxu0 0.0
    %227 = vmatpush2.msra.mxu0 0.0
    %228 = vmatprep.subr.mxu0 0.0
    %229 = vmatpush2.msra.mxu0 0.0
    %230 = vmatprep.subr.mxu0 0.0
    %231 = vmatpush2.msra.mxu0 0.0
    %232 = vmatprep.subr.mxu0 0.0
    %233 = vmatpush2.msra.mxu0 0.0
    %234 = vmatprep.subr.mxu0 0.0
    %235 = vmatpush2.msra.mxu0 0.0
    %236 = vmatprep.subr.mxu0 0.0
    %237 = vmatpush2.msra.mxu0 0.0
    %238 = vmatprep.subr.mxu0 0.0
    %239 = vmatpush2.msra.mxu0 0.0
    %240 = vmatprep.subr.mxu0 0.0
    %241 = vmatpush2.msra.mxu0 0.0
    %242 = vmatprep.subr.mxu0 0.0
    %243 = vmatpush2.msra.mxu0 0.0
    %244 = vmatprep.subr.mxu0 0.0
    %245 = vmatpush2.msra.mxu0 0.0
    %246 = vmatprep.subr.mxu0 0.0
    %247 = vmatpush2.msra.mxu0 0.0
    %248 = vmatprep.subr.mxu0 0.0
    %249 = vmatpush2.msra.mxu0 0.0
    %250 = vmatprep.subr.mxu0 0.0
    %251 = vmatpush2.msra.mxu0 0.0
    %252 = vmatprep.subr.mxu0 0.0
    %253 = vmatpush2.msra.mxu0 0.0
    %254 = vmatprep.subr.mxu0 0.0
    %255 = vmatpush2.msra.mxu0 0.0
    %256 = vmatprep.subr.mxu0 0.0
    %257 = vmatpush2.msra.mxu0 0.0
    %258 = vmatprep.mubr.f32.mxu0 0.0
    %259 = vmatmul.mubr.f32.gmra.mxu0 %v183
    %v260 = vpop.f32.mrf.mxu0
    %v261 = vadd.f32 %v164, %v260
    %v262 = vpop.f32.mrf.mxu0
    %263 = vmatprep.mubr.f32.mxu0 0.0
    %264 = vmatmul.mubr.f32.gmra.mxu0 %v186
    %v265 = vpop.f32.mrf.mxu0
    %v266 = vadd.f32 %v169, %v265
    %v267 = vpop.f32.mrf.mxu0
    %268 = vmatprep.mubr.f32.mxu0 0.0
    %269 = vmatmul.mubr.f32.gmra.mxu0 %v189
    %v270 = vpop.f32.mrf.mxu0
    %v271 = vadd.f32 %v174, %v270
    %v272 = vpop.f32.mrf.mxu0
    %273 = vmatprep.mubr.f32.mxu0 0.0
    %274 = vmatmul.mubr.f32.gmra.mxu0 %v192
    %v275 = vpop.f32.mrf.mxu0
    %v276 = vadd.f32 %v179, %v275
    %v277 = vpop.f32.mrf.mxu0
    %278 = vdwg.mxu0
    %v279 = vtanh.pop %v261
    %v280 = vtanh.pop %v266
    %v281 = vtanh.pop %v271
    %v282 = vtanh.pop %v276
    %v283 = vld [vmem:[%s5] sm:$0xff]
    %v284 = vld [vmem:[%s5 + $0x8] sm:$0xff]
    %v285 = vld [vmem:[%s5 + $0x10] sm:$0xff]
    %v286 = vld [vmem:[%s5 + $0x18] sm:$0xff]
    %288 = vset.pattern.permute.xlu0 0
    %289 = vperm.xlu0 %288, %v283
    %v290 = vpop.permute.xlu0 %289
    %293 = vset.pattern.permute.xlu0 0
    %294 = vperm.xlu0 %293, %v284
    %v295 = vpop.permute.xlu0 %294
    %298 = vset.pattern.permute.xlu0 0
    %299 = vperm.xlu0 %298, %v285
    %v300 = vpop.permute.xlu0 %299
    %303 = vset.pattern.permute.xlu0 0
    %304 = vperm.xlu0 %303, %v286
    %v305 = vpop.permute.xlu0 %304
    %v307 = vmul.f32 %v290, %v279
    %v308 = vmul.f32 %v295, %v280
    %v309 = vmul.f32 %v300, %v281
    %v310 = vmul.f32 %v305, %v282
    %v311 = vadd.f32 %v307, %v308
    %v312 = vadd.f32 %v311, %v309
    %v313 = vadd.f32 %v312, %v310
    %v314 = vrot.slane %v313, 4
    %v315 = vadd.f32 %v313, %v314
    %v316 = vrot.slane %v315, 2
    %v317 = vadd.f32 %v315, %v316
    %v318 = vrot.slane %v317, 1
    %v319 = vadd.f32 %v317, %v318
    %s320 = sld [smem:[#allocation2]]
    %v321 = vstv %s320
    %v322 = vadd.f32 %v319, %v321
    %v323 = vmul.f32 %v32, %v32
    %vm324 = vcmask 1042432
    %v325 = vsel %vm324, %v323, 0.0
    %v326 = vrot.slane %v325, 4
    %v327 = vadd.f32 %v325, %v326
    %v328 = vrot.slane %v327, 2
    %v329 = vadd.f32 %v327, %v328
    %v330 = vrot.slane %v329, 1
    %v331 = vadd.f32 %v329, %v330
    %v332 = vmax.f32 %v331, 1e-37
    %v333 = vlog2.pop %v332
    %v334 = vmul.f32 %v333, 0.6931472
    %v335 = vmul.f32 %v322, 0.5
    %v336 = vmul.f32 %v335, %v334
    %v337 = vmul.f32 %v336, 1.442695
    %v338 = vpow.pop %v337
    %vm339 = vcmp.gt.f32.partialorder %v322, 0.0
    %vm340 = vcmp.lt.f32.partialorder %v322, 0.0
    %v341 = vsel %vm340, inf, 1.0
    %v342 = vsel %vm339, 0.0, %v341
    %vm343 = vcmp.gt.f32.partialorder %v331, 0.0
    %v344 = vsel %vm343, %v338, %v342
    %s345 = sld [smem:[#allocation3]]
    %s346 = smul.f32 %s345, 3.9
    %v347 = vstv %s346
    %v348 = vmul.f32 %v347, %v344
    %349 = vst [vmem:[#allocation4] sm:$0x1] %v348
    // Predicated region
    $region34: #{tpu_custom_call.1} parent=1 // pred_check
      _
    $region35: #{tpu_custom_call.1} parent=1 // pred_check_branch
      %351 = sbr.rel (0) target = $region37
    $region36: #{tpu_custom_call.1} parent=1 // pred_region
      %s353 = ssub.s32 16, 16
      %354 = vsyncadd [#allocation5], %s353
      %s356 = sshll.u32 [#allocation4], 4
      %s357 = int_to_ptr.vmem [resolvable:$true] %s356
      %359 = dma.vmem_to_hbm [thread:$0]  %s357, 16, %s8, [#allocation5]
    $region37: #{tpu_custom_call.1} parent=1 // pred_fallthru
      _
    // Predicated region
    $region38: #{tpu_custom_call.1} parent=1 // pred_check
      _
    $region39: #{tpu_custom_call.1} parent=1 // pred_check_branch
      %361 = sbr.rel (0) target = $region41
    $region40: #{tpu_custom_call.1} parent=1 // pred_region
      %362 = dma.done [#allocation5], 16
    $region41: #{tpu_custom_call.1} parent=1 // pred_fallthru
      _
    %363 = vsyncpa [#allocation5], 1

</llo_original>
